<compile_context>
chip_gen: v7x
topology: tpu7x:2x2x1
jax: 0.10.0
libtpu: 0.0.40
codegen_flags: <defaults>
</compile_context>

<pallas_src>
import numpy as np
import jax
import jax.numpy as jnp
from jax.experimental import pallas as pl
from jax.experimental.pallas import tpu as pltpu


ACT_DTYPE = jnp.bfloat16          # kernel-boundary dtype (accumulation is f32)
COUT_BLK_MAX = 256                # Cout tile (matches 256-deep MXU on v6e/v7x)
VMEM_FLOOR = 32 * 1024 * 1024
VMEM_CEIL = 100 * 1024 * 1024     # below 128 MiB physical on v5e/v6e


def _round_up(x, m):
    return (x + m - 1) // m * m


# ----------------------------------------------------------------------------
# Conv2d (stride=1, zero padding) + optional LeakyReLU, channel-concat fused.
#
# The padded NHWC input is flattened to (N, Lflat, Cin).  For output flat index
# q = h*Wp + w, tap (kh, kw) reads flat index q + kh*Wp + kw, so every tap is a
# contiguous sublane slice.  All taps (and both Cin splits of a fused concat)
# are concatenated along lanes into one (MBLK, KH*KW*Cin_tot) patch and the
# whole block is ONE matmul against the (KH*KW*Cin_tot, COUT_BLK) weight tile.
# Bias + LeakyReLU are fused in the epilogue.  The "wide" output has width Wp;
# the KW-1 wrap-around garbage columns are cropped by the wrapper.
# ----------------------------------------------------------------------------
def _make_conv_kernel(num_in, KH, KW, Wp, MBLK, slope, channel_major_out):
    def kernel(*refs):
        x_refs = refs[:num_in]                # each (1, Lflat_i, Cin_i)
        w_ref = refs[num_in]                  # (Kflat, COUT_BLK), VMEM-resident
        b_ref = refs[num_in + 1]              # (1, COUT_BLK) f32
        o_ref = refs[num_in + 2]              # (1, MBLK, COUT_BLK) or (1, COUT_BLK, MBLK)

        base = pl.multiple_of(pl.program_id(1) * MBLK, MBLK)

        # Fold taps + Cin splits into the K dim of a single matmul.
        taps = []
        for kh in range(KH):
            for kw in range(KW):
                off = kh * Wp + kw
                for x_ref in x_refs:          # fused channel concat
                    taps.append(x_ref[0, pl.ds(base + off, MBLK), :])
        patch = taps[0] if len(taps) == 1 else jnp.concatenate(taps, axis=-1)

        y = jnp.dot(patch, w_ref[...], preferred_element_type=jnp.float32)
        y = y + b_ref[...].astype(jnp.float32)
        if slope is not None:
            y = jnp.where(y >= 0, y, slope * y)            # fused LeakyReLU

        if channel_major_out:
            # Lane-dense store: (COUT_BLK, MBLK) with flat-M on lanes.
            o_ref[0, :, :] = jnp.transpose(y).astype(o_ref.dtype)
        else:
            o_ref[0, :, :] = y.astype(o_ref.dtype)

    return kernel


def conv2d_fused(xs, ws, b, *, padding, slope=None, out_dtype=ACT_DTYPE,
                 channel_major_out=False):
    """Conv2d stride=1 (+ optional fused LeakyReLU) over the channel-concat of
    the NHWC activations in `xs` (weights `ws` are the matching Cin splits).
    With channel_major_out=True the result is returned in NCHW layout."""
    N, H, W, _ = xs[0].shape
    KH, KW, _, Cout = ws[0].shape
    Hp, Wp = H + 2 * padding, W + 2 * padding
    Hout, Wout = Hp - KH + 1, Wp - KW + 1

    # Cout tiling (bounds accumulator / resident weight at production Cout).
    # channel-major output pads Cout to >=8 so the in-kernel transpose and the
    # (COUT_BLK, MBLK) store stay on clean (8, 128) tiles.
    Cout_eff = _round_up(Cout, 8) if channel_major_out else Cout
    COUT_BLK = min(COUT_BLK_MAX, Cout_eff)
    Cout_pad = _round_up(Cout_eff, COUT_BLK)
    num_co = Cout_pad // COUT_BLK

    # Flat-M tiling; keep MBLK*COUT_BLK bounded (vreg / spill budget).
    MBLK_MAX = 512 if COUT_BLK <= 128 else 256
    Mwide = Hout * Wp
    MBLK = min(MBLK_MAX, _round_up(Mwide, 8))
    num_mb = pl.cdiv(Mwide, MBLK)
    M_pad = num_mb * MBLK
    max_off = (KH - 1) * Wp + (KW - 1)
    Lpad = M_pad + max_off                       # keeps every tap slice in bounds

    # Single merged pad: spatial zero-pad plus enough extra (zero) bottom rows
    # that the flattened image covers all in-kernel tap slices.
    rows = max(Hp, -(-Lpad // Wp))
    Lflat = rows * Wp
    x_flats, cins = [], []
    for x in xs:
        cin = x.shape[-1]
        xp = jnp.pad(x.astype(ACT_DTYPE),
                     ((0, 0), (padding, rows - H - padding),
                      (padding, padding), (0, 0)))
        x_flats.append(xp.reshape(N, Lflat, cin))
        cins.append(cin)

    # Weight flattened to (KH*KW*Cin_tot, Cout); row order matches the in-kernel
    # tap concatenation order (kh, kw, then split0 channels, split1 channels).
    w_full = ws[0] if len(ws) == 1 else jnp.concatenate(ws, axis=2)
    Kflat = KH * KW * sum(cins)
    w_flat = w_full.reshape(Kflat, Cout).astype(ACT_DTYPE)
    b2 = b.reshape(1, Cout).astype(jnp.float32)
    if Cout_pad != Cout:
        w_flat = jnp.pad(w_flat, ((0, 0), (0, Cout_pad - Cout)))
        b2 = jnp.pad(b2, ((0, 0), (0, Cout_pad - Cout)))

    in_specs = (
        # Whole flat image per batch element (re-used across all M/Cout blocks).
        # TODO(synk): M-halo tiled BlockSpec for production sizes on v7x.
        [pl.BlockSpec((1, Lflat, c), lambda n, m, co: (n, 0, 0)) for c in cins]
        + [pl.BlockSpec((Kflat, COUT_BLK), lambda n, m, co: (0, co)),
           pl.BlockSpec((1, COUT_BLK), lambda n, m, co: (0, co))])

    out_item = np.dtype(out_dtype).itemsize
    if channel_major_out:
        out_shape = jax.ShapeDtypeStruct((N, Cout_pad, M_pad), out_dtype)
        out_spec = pl.BlockSpec((1, COUT_BLK, MBLK), lambda n, m, co: (n, co, m))
    else:
        out_shape = jax.ShapeDtypeStruct((N, M_pad, Cout_pad), out_dtype)
        out_spec = pl.BlockSpec((1, MBLK, COUT_BLK), lambda n, m, co: (n, m, co))

    # Per-layer VMEM budget (double-buffered blocks + headroom), clamped.
    block_bytes = (sum(Lflat * c * 2 for c in cins)
                   + Kflat * COUT_BLK * 2 + COUT_BLK * 4
                   + MBLK * COUT_BLK * out_item)
    vmem_limit = int(min(VMEM_CEIL, max(VMEM_FLOOR, 2 * block_bytes + (4 << 20))))

    kernel = _make_conv_kernel(len(xs), KH, KW, Wp, MBLK, slope, channel_major_out)
    ywide = pl.pallas_call(
        kernel,
        out_shape=out_shape,
        grid_spec=pltpu.PrefetchScalarGridSpec(
            num_scalar_prefetch=0,
            grid=(N, num_mb, num_co),
            in_specs=in_specs,
            out_specs=out_spec),
        compiler_params=pltpu.CompilerParams(
            dimension_semantics=("parallel", "parallel", "parallel"),
            vmem_limit_bytes=vmem_limit),
    )(*x_flats, w_flat, b2)

    # Crop M padding, wrap-around garbage columns and Cout padding.
    # TODO(synk): write directly into the next conv's padded flat layout instead.
    if channel_major_out:
        y = ywide[:, :Cout, :Mwide].reshape(N, Cout, Hout, Wp)[:, :, :, :Wout]
    else:
        y = ywide[:, :Mwide, :Cout].reshape(N, Hout, Wp, Cout)[:, :, :Wout, :]
    return y


# ----------------------------------------------------------------------------
# Bilinear resize (align_corners=True), NHWC in / NHWC out, pure VPU lerps
# (lanes = C).  Static two-tap row/column interpolation; one grid step per
# batch element; no transposes and no tiny per-channel matmuls.
# ----------------------------------------------------------------------------
def _bilinear_taps(out_size, in_size):
    scale = 0.0 if out_size == 1 else (in_size - 1) / (out_size - 1)
    taps = []
    for i in range(out_size):
        src = i * scale
        i0 = min(int(np.floor(src)), in_size - 1)
        i1 = min(i0 + 1, in_size - 1)
        taps.append((i0, i1, float(src - i0)))
    return taps


def _make_resize_kernel(h_taps, w_taps):
    def kernel(x_ref, o_ref):
        # H interpolation (static unrolled two-tap lerps over rows).
        rows = []
        for (h0, h1, lam) in h_taps:
            r0 = x_ref[0, h0, :, :].astype(jnp.float32)          # (Win, C)
            if lam == 0.0 or h1 == h0:
                rows.append(r0)
            else:
                r1 = x_ref[0, h1, :, :].astype(jnp.float32)
                rows.append((1.0 - lam) * r0 + lam * r1)
        t = jnp.stack(rows, axis=0)                              # (Hout, Win, C)
        # W interpolation.
        cols = []
        for (w0, w1, lam) in w_taps:
            c0 = t[:, w0, :]                                     # (Hout, C)
            if lam == 0.0 or w1 == w0:
                cols.append(c0)
            else:
                cols.append((1.0 - lam) * c0 + lam * t[:, w1, :])
        out = jnp.stack(cols, axis=1)                            # (Hout, Wout, C)
        o_ref[0, :, :, :] = out.astype(o_ref.dtype)
    return kernel


def bilinear_resize_nhwc(x, Hout, Wout):
    """F.interpolate(mode='bilinear', align_corners=True) on NHWC activations.
    TODO(synk): tile H/W (instead of fully unrolled lerps) for production sizes."""
    N, Hin, Win, C = x.shape
    if Hin == Hout and Win == Wout:          # align_corners identity resize
        return x
    return pl.pallas_call(
        _make_resize_kernel(_bilinear_taps(Hout, Hin), _bilinear_taps(Wout, Win)),
        out_shape=jax.ShapeDtypeStruct((N, Hout, Wout, C), x.dtype),
        grid_spec=pltpu.PrefetchScalarGridSpec(
            num_scalar_prefetch=0,
            grid=(N,),
            in_specs=[pl.BlockSpec((1, Hin, Win, C), lambda n: (n, 0, 0, 0))],
            out_specs=pl.BlockSpec((1, Hout, Wout, C), lambda n: (n, 0, 0, 0))),
        compiler_params=pltpu.CompilerParams(
            dimension_semantics=("parallel",),
            vmem_limit_bytes=VMEM_FLOOR),
    )(x)


# ----------------------------------------------------------------------------
# UpSample block + Decoder forward (glue in plain JAX; compute in the kernels).
# ----------------------------------------------------------------------------
def upsample_block(x_nhwc, skip_nhwc, p):
    _, Hs, Ws, _ = skip_nhwc.shape
    up_nhwc = bilinear_resize_nhwc(x_nhwc, Hs, Ws)      # stays NHWC: no transposes
    c_up = up_nhwc.shape[-1]
    # convA with the channel concat fused: weight split along Cin.
    y = conv2d_fused([up_nhwc, skip_nhwc],
                     [p["wA"][:, :, :c_up, :], p["wA"][:, :, c_up:, :]],
                     p["bA"], padding=1, slope=0.2)              # convA + leakyreluA
    return conv2d_fused([y], [p["wB"]], p["bB"], padding=1, slope=0.2)  # convB + leakyreluB


def decoder_forward(features, params):
    """features: list of NCHW arrays (PyTorch convention); returns NCHW output."""
    xb0, xb1, xb2, xb3, xb4 = (features[3], features[4], features[6],
                               features[8], features[11])
    to_nhwc = lambda t: jnp.transpose(t, (0, 2, 3, 1)).astype(ACT_DTYPE)
    xb0, xb1, xb2, xb3, xb4 = map(to_nhwc, (xb0, xb1, xb2, xb3, xb4))

    x_d0 = conv2d_fused([xb4], [params["conv2"]["w"]], params["conv2"]["b"], padding=1)
    x_d1 = upsample_block(x_d0, xb3, params["up1"])
    x_d2 = upsample_block(x_d1, xb2, params["up2"])
    x_d3 = upsample_block(x_d2, xb1, params["up3"])
    x_d4 = upsample_block(x_d3, xb0, params["up4"])
    # conv3 uses the lane-dense channel-major epilogue -> NCHW output directly.
    return conv2d_fused([x_d4], [params["conv3"]["w"]], params["conv3"]["b"],
                        padding=1, out_dtype=jnp.float32, channel_major_out=True)


# ----------------------------------------------------------------------------
# Deterministic parameter construction (synthetic; same shapes as nn.Module).
# ----------------------------------------------------------------------------
def init_params(key, num_features, decoder_width, skip_channels):
    features = int(num_features * decoder_width)
    c0, c1, c2, c3 = skip_channels                 # block0..block3 channel counts

    def conv_param(k, kh, kw, cin, cout):
        kw_, kb_ = jax.random.split(k)
        scale = 1.0 / np.sqrt(kh * kw * cin)
        w = jax.random.normal(kw_, (kh, kw, cin, cout), jnp.float32) * scale
        b = jax.random.normal(kb_, (cout,), jnp.float32) * scale
        return w, b

    keys = jax.random.split(key, 10)
    params = {}
    w, b = conv_param(keys[0], 1, 1, num_features, features)
    params["conv2"] = {"w": w, "b": b}

    def up_params(kA, kB, skip_in, out_f):
        wA, bA = conv_param(kA, 3, 3, skip_in, out_f)
        wB, bB = conv_param(kB, 3, 3, out_f, out_f)
        return {"wA": wA, "bA": bA, "wB": wB, "bB": bB}

    params["up1"] = up_params(keys[1], keys[2], features // 1 + c3, features // 2)
    params["up2"] = up_params(keys[3], keys[4], features // 2 + c2, features // 4)
    params["up3"] = up_params(keys[5], keys[6], features // 4 + c1, features // 8)
    params["up4"] = up_params(keys[7], keys[8], features // 8 + c0, features // 16)
    w, b = conv_param(keys[9], 3, 3, features // 16, 1)
    params["conv3"] = {"w": w, "b": b}
    return params, features


if __name__ == "__main__":
    key = jax.random.PRNGKey(0)
    # Scaled-down hyperparameters (original: num_features=2208, skips 96/96/192/384).
    num_features, decoder_width = 64, 0.5
    skip_channels = (8, 8, 8, 16)                  # (c0, c1, c2, c3)
    params, features_ch = init_params(key, num_features, decoder_width, skip_channels)

    B = 2
    kk = jax.random.split(jax.random.PRNGKey(0), 6)
    xb4 = jax.random.normal(kk[1], (B, num_features, 2, 2), jnp.float32)        # features[11]
    xb3 = jax.random.normal(kk[2], (B, skip_channels[3], 4, 4), jnp.float32)    # features[8]
    xb2 = jax.random.normal(kk[3], (B, skip_channels[2], 8, 8), jnp.float32)    # features[6]
    xb1 = jax.random.normal(kk[4], (B, skip_channels[1], 16, 16), jnp.float32)  # features[4]
    xb0 = jax.random.normal(kk[5], (B, skip_channels[0], 32, 32), jnp.float32)  # features[3]

    features = [jnp.zeros((1, 1, 1, 1), jnp.float32) for _ in range(12)]
    features[3], features[4], features[6], features[8], features[11] = xb0, xb1, xb2, xb3, xb4

    out = decoder_forward(features, params)
    out = jax.block_until_ready(out)
    assert out.shape == (B, 1, 32, 32), out.shape
    assert bool(jnp.all(jnp.isfinite(out)))
    print("KERNEL_OK")
</pallas_src>

<mosaic_0001>
module attributes {stable_mosaic.version = 11 : i64} {
  func.func @kernel(%arg0: i32, %arg1: i32, %arg2: i32, %arg3: memref<1x16x64xbf16, #tpu.memory_space<vmem>>, %arg4: memref<64x32xbf16, #tpu.memory_space<vmem>>, %arg5: memref<1x32xf32, #tpu.memory_space<vmem>>, %arg6: memref<1x16x32xbf16, #tpu.memory_space<vmem>>) attributes {dimension_semantics = [#tpu.dimension_semantics<parallel>, #tpu.dimension_semantics<parallel>, #tpu.dimension_semantics<parallel>], iteration_bounds = array<i64: 2, 1, 1>, scalar_prefetch = 0 : i64, scratch_operands = 0 : i64, tpu.core_type = #tpu.core_type<tc>, window_params = [{transform_indices = @transform_0, window_bounds = array<i64: 1, 16, 64>}, {transform_indices = @transform_1, window_bounds = array<i64: 64, 32>}, {transform_indices = @transform_2, window_bounds = array<i64: 1, 32>}, {transform_indices = @transform_3, window_bounds = array<i64: 1, 16, 32>}]} {
    %c16_i32 = arith.constant 16 : i32
    %0 = arith.muli %arg1, %c16_i32 : i32
    %1 = tpu.assume_multiple %0, 16 : i32
    %c0_i32 = arith.constant 0 : i32
    %2 = arith.addi %1, %c0_i32 : i32
    %c0 = arith.constant 0 : index
    %3 = arith.index_cast %2 : i32 to index
    %c0_0 = arith.constant 0 : index
    %4 = vector.load %arg3[%c0, %3, %c0_0] : memref<1x16x64xbf16, #tpu.memory_space<vmem>>, vector<1x16x64xbf16>
    %5 = vector.shape_cast %4 : vector<1x16x64xbf16> to vector<16x64xbf16>
    %c0_1 = arith.constant 0 : index
    %c0_2 = arith.constant 0 : index
    %6 = vector.load %arg4[%c0_1, %c0_2] : memref<64x32xbf16, #tpu.memory_space<vmem>>, vector<64x32xbf16>
    %cst = arith.constant dense<0.000000e+00> : vector<16x32xf32>
    %7 = tpu.matmul %5, %6, %cst {dimension_numbers = #tpu.dot_dimension_numbers<[1], [0], [0], [1], [0, 0, 1, 1], [], []>} : vector<16x64xbf16>, vector<64x32xbf16>, vector<16x32xf32> -> vector<16x32xf32>
    %c0_3 = arith.constant 0 : index
    %c0_4 = arith.constant 0 : index
    %8 = vector.load %arg5[%c0_3, %c0_4] : memref<1x32xf32, #tpu.memory_space<vmem>>, vector<1x32xf32>
    %9 = vector.broadcast %8 : vector<1x32xf32> to vector<16x32xf32>
    %10 = arith.addf %7, %9 : vector<16x32xf32>
    %11 = arith.truncf %10 : vector<16x32xf32> to vector<16x32xbf16>
    %c0_5 = arith.constant 0 : index
    %c0_6 = arith.constant 0 : index
    %c0_7 = arith.constant 0 : index
    %12 = vector.load %arg6[%c0_5, %c0_6, %c0_7] : memref<1x16x32xbf16, #tpu.memory_space<vmem>>, vector<1x16x32xbf16>
    %13 = vector.shape_cast %12 : vector<1x16x32xbf16> to vector<16x32xbf16>
    %14 = vector.shape_cast %11 : vector<16x32xbf16> to vector<1x16x32xbf16>
    tpu.vector_store %arg6[%c0_5, %c0_6, %c0_7], %14 {strides = array<i32>} : memref<1x16x32xbf16, #tpu.memory_space<vmem>>, vector<1x16x32xbf16>,
    return
  }
  func.func @transform_0(%arg0: i32, %arg1: i32, %arg2: i32) -> (i32, i32, i32) {
    %c0_i32 = arith.constant 0 : i32
    %c0_i32_0 = arith.constant 0 : i32
    %c0_i32_1 = arith.constant 0 : i32
    return %arg0, %c0_i32, %c0_i32_0 : i32, i32, i32
  }
  func.func @transform_1(%arg0: i32, %arg1: i32, %arg2: i32) -> (i32, i32) {
    %c0_i32 = arith.constant 0 : i32
    %c0_i32_0 = arith.constant 0 : i32
    return %c0_i32, %arg2 : i32, i32
  }
  func.func @transform_2(%arg0: i32, %arg1: i32, %arg2: i32) -> (i32, i32) {
    %c0_i32 = arith.constant 0 : i32
    %c0_i32_0 = arith.constant 0 : i32
    return %c0_i32, %arg2 : i32, i32
  }
  func.func @transform_3(%arg0: i32, %arg1: i32, %arg2: i32) -> (i32, i32, i32) {
    %c0_i32 = arith.constant 0 : i32
    return %arg0, %arg1, %arg2 : i32, i32, i32
  }
}

</mosaic_0001>

<llo_original>
// kernel: tpu_custom_call.1
$region0: #{tpu_custom_call.1}
  #allocation0 [shape = 'u32[]', space=smem, size = 0x4, offset = 0x4, fixed_abs, tag = 'smem constant byte address 0x4 - core index']
  #allocation1 [shape = 'u32[144,128]{1,0:T(1,128)}', space=vmem, size = 0x12000, scoped, tag = 'internal scratch']
  %s0 = inlined_call_operand.vmem [shape: bf16[2,16,64], index: 0, kind: input, shape index: {}]
  %s1 = inlined_call_operand.vmem [shape: bf16[64,32], index: 1, kind: input, shape index: {}]
  %s2 = inlined_call_operand.vmem [shape: f32[1,32], index: 2, kind: input, shape index: {}]
  %s3 = inlined_call_operand.hbm [shape: bf16[2,16,32], index: 3, kind: output, shape index: {}]
  %s4 = sld [smem:[#allocation0]]
  $region45: #{tpu_custom_call.1} parent=0
    _
  %s6 = ssub.s32 1, %s4
  %s7 = scalar_select 0, %s6, %s4
  $region1: #{tpu_custom_call.1} parent=0
    #allocation2 [shape = 'u8[8192]{0}', space=vmem, size = 0x2000, scoped, tag = 'output window, operand 0']
    #allocation3 [shape = 's32[2]{0}', space=sflag, size = 0x8, scoped, tag = 'scoped memory for tpu_custom_call.1']
    %8 = vsyncpa [#allocation3], 0
    %s9 = scalar_lea.sflag [#allocation3], 1
    %10 = vsyncpa %s9, 0
    loop: start=0, step=1, limit=4
    $region2: #{tpu_custom_call.1} parent=1 // loop_pre_header
      _
    $region3: #{tpu_custom_call.1} parent=1 // loop_header
      %s12 = sphi 0, %s16
      %p13 = scmp.ge.s32.totalorder %s12, 4
      %s19 = sphi 0, %s38
      %s20 = sphi 0, %s34
      %s21 = sphi 0, %s30
      %s22 = sphi 0, %s19
      %s23 = sphi 0, %s20
      %s24 = sphi 0, %s21
      %s25 = sphi 0, %s22
      %s26 = sphi 0, %s23
      %s27 = sphi 0, %s24
      %s41 = sphi 0, %s43
      %s44 = sphi 0, %s41
      %s45 = sphi 0, %s44
      %s61 = sphi 0, %s45
      %s67 = sphi 0, %s69
      %s70 = sphi 0, %s67
      %s71 = sphi 0, %s70
      %s87 = sphi 0, %s71
      %s93 = sphi 0, %s95
      %s96 = sphi 0, %s93
      %s97 = sphi 0, %s96
      %s113 = sphi 0, %s97
      %s123 = sphi 0, %s125
      %s126 = sphi 0, %s123
      %s127 = sphi 0, %s126
      %s143 = sphi 0, %s127
    $region4: #{tpu_custom_call.1} parent=1 // loop_header_branch
      %15 = sbr.rel (%p13) target = $region8
    $region5: #{tpu_custom_call.1} parent=1 // loop_body
      %s17 = ssub.s32 %s12, 1
      %s18 = ssub.s32 %s12, 2
      %s28 = sadd.s32 1, %s21
      %p29 = scmp.ge.s32.totalorder %s28, 1
      %s30 = scalar_select %p29, 0, %s28
      %s31 = sadd.s32 1, %s20
      %s32 = scalar_select %p29, %s31, %s20
      %p33 = scmp.ge.s32.totalorder %s32, 1
      %s34 = scalar_select %p33, 0, %s32
      %s35 = sadd.s32 1, %s19
      %s36 = scalar_select %p33, %s35, %s19
      %p37 = scmp.ge.s32.totalorder %s36, 2
      %s38 = scalar_select %p37, 0, %s36
      %s39 = ssub.s32 %s19, %s38
      %p40 = scmp.eq.s32.totalorder %s39, 0
      %s42 = sadd.s32 %s41, 1
      %s43 = scalar_select %p40, %s41, %s42
      %p46 = pneg %p40
      %p47 = scmp.eq.s32.totalorder %s12, 1
      %p48 = por %p46, %p47
      %p49 = scmp.ne.s32.totalorder %s41, %s44
      %p50 = scmp.eq.s32.totalorder %s12, 0
      %p51 = por %p49, %p50
      %p52 = scmp.ne.s32.totalorder %s41, %s44
      %p53 = scmp.eq.s32.totalorder %s17, 1
      %p54 = por %p52, %p53
      %p55 = scmp.ne.s32.totalorder %s44, %s45
      %p56 = scmp.eq.s32.totalorder %s17, 0
      %p57 = por %p55, %p56
      %p58 = scmp.ne.s32.totalorder %s44, %s45
      %p59 = scmp.eq.s32.totalorder %s18, 1
      %p60 = por %p58, %p59
      %p62 = scmp.ne.s32.totalorder %s45, %s61
      %p63 = scmp.eq.s32.totalorder %s18, 0
      %p64 = por %p62, %p63
      %s65 = ssub.s32 %s21, %s30
      %p66 = scmp.eq.s32.totalorder %s65, 0
      %s68 = sadd.s32 %s67, 1
      %s69 = scalar_select %p66, %s67, %s68
      %p72 = pneg %p66
      %p73 = scmp.eq.s32.totalorder %s12, 1
      %p74 = por %p72, %p73
      %p75 = scmp.ne.s32.totalorder %s67, %s70
      %p76 = scmp.eq.s32.totalorder %s12, 0
      %p77 = por %p75, %p76
      %p78 = scmp.ne.s32.totalorder %s67, %s70
      %p79 = scmp.eq.s32.totalorder %s17, 1
      %p80 = por %p78, %p79
      %p81 = scmp.ne.s32.totalorder %s70, %s71
      %p82 = scmp.eq.s32.totalorder %s17, 0
      %p83 = por %p81, %p82
      %p84 = scmp.ne.s32.totalorder %s70, %s71
      %p85 = scmp.eq.s32.totalorder %s18, 1
      %p86 = por %p84, %p85
      %p88 = scmp.ne.s32.totalorder %s71, %s87
      %p89 = scmp.eq.s32.totalorder %s18, 0
      %p90 = por %p88, %p89
      %s91 = ssub.s32 %s21, %s30
      %p92 = scmp.eq.s32.totalorder %s91, 0
      %s94 = sadd.s32 %s93, 1
      %s95 = scalar_select %p92, %s93, %s94
      %p98 = pneg %p92
      %p99 = scmp.eq.s32.totalorder %s12, 1
      %p100 = por %p98, %p99
      %p101 = scmp.ne.s32.totalorder %s93, %s96
      %p102 = scmp.eq.s32.totalorder %s12, 0
      %p103 = por %p101, %p102
      %p104 = scmp.ne.s32.totalorder %s93, %s96
      %p105 = scmp.eq.s32.totalorder %s17, 1
      %p106 = por %p104, %p105
      %p107 = scmp.ne.s32.totalorder %s96, %s97
      %p108 = scmp.eq.s32.totalorder %s17, 0
      %p109 = por %p107, %p108
      %p110 = scmp.ne.s32.totalorder %s96, %s97
      %p111 = scmp.eq.s32.totalorder %s18, 1
      %p112 = por %p110, %p111
      %p114 = scmp.ne.s32.totalorder %s97, %s113
      %p115 = scmp.eq.s32.totalorder %s18, 0
      %p116 = por %p114, %p115
      %s117 = ssub.s32 %s19, %s38
      %s118 = ssub.s32 %s20, %s34
      %s119 = sor.u32 %s117, %s118
      %s120 = ssub.s32 %s21, %s30
      %s121 = sor.u32 %s119, %s120
      %p122 = scmp.eq.s32.totalorder %s121, 0
      %s124 = sadd.s32 %s123, 1
      %s125 = scalar_select %p122, %s123, %s124
      %p128 = pneg %p122
      %p129 = scmp.eq.s32.totalorder %s12, 1
      %p130 = por %p128, %p129
      %p131 = scmp.ne.s32.totalorder %s123, %s126
      %p132 = scmp.eq.s32.totalorder %s12, 0
      %p133 = por %p131, %p132
      %p134 = scmp.ne.s32.totalorder %s123, %s126
      %p135 = scmp.eq.s32.totalorder %s17, 1
      %p136 = por %p134, %p135
      %p137 = scmp.ne.s32.totalorder %s126, %s127
      %p138 = scmp.eq.s32.totalorder %s17, 0
      %p139 = por %p137, %p138
      %p140 = scmp.ne.s32.totalorder %s126, %s127
      %p141 = scmp.eq.s32.totalorder %s18, 1
      %p142 = por %p140, %p141
      %p144 = scmp.ne.s32.totalorder %s127, %s143
      %p145 = scmp.eq.s32.totalorder %s18, 0
      %p146 = por %p144, %p145
      %p147 = scmp.le.s32.totalorder 1, %s12
      %p148 = scmp.lt.s32.totalorder %s12, 3
      %p149 = pnand %p147, %p148
      %p150 = pneg %p149
      // Predicated region
      $region9: #{tpu_custom_call.1} parent=5 // pred_check
        _
      $region10: #{tpu_custom_call.1} parent=5 // pred_check_branch
        %152 = sbr.rel (%p149) target = $region12
      $region11: #{tpu_custom_call.1} parent=5 // pred_region
        %s153 = ssub.s32 %s12, 1
        // Predicated region
        $region13: #{tpu_custom_call.1} parent=11 // pred_check
          %p154 = pneg %p83
        $region14: #{tpu_custom_call.1} parent=11 // pred_check_branch
          %156 = sbr.rel (%p154) target = $region16
        $region15: #{tpu_custom_call.1} parent=11 // pred_region
          %p157 = scmp.lt.s32.totalorder %s24, 0
          %s158 = scalar_select %p157, %s24, 0
          %s159 = smul.addr %s158, 4
          %s160 = scalar_lea.vmem %s1, %s159
        $region16: #{tpu_custom_call.1} parent=11 // pred_fallthru
          _
        // Predicated region
        $region17: #{tpu_custom_call.1} parent=11 // pred_check
          %p161 = pneg %p109
        $region18: #{tpu_custom_call.1} parent=11 // pred_check_branch
          %163 = sbr.rel (%p161) target = $region20
        $region19: #{tpu_custom_call.1} parent=11 // pred_region
          %p164 = scmp.lt.s32.totalorder %s24, 0
          %s165 = scalar_select %p164, %s24, 0
          %s166 = scalar_lea.vmem %s2, %s165
        $region20: #{tpu_custom_call.1} parent=11 // pred_fallthru
          _
      $region12: #{tpu_custom_call.1} parent=5 // pred_fallthru
        _
      %p167 = scmp.lt.s32.totalorder %s12, 2
      // Predicated region
      $region21: #{tpu_custom_call.1} parent=5 // pred_check
        %p168 = pneg %p167
      $region22: #{tpu_custom_call.1} parent=5 // pred_check_branch
        %170 = sbr.rel (%p168) target = $region24
      $region23: #{tpu_custom_call.1} parent=5 // pred_region
        // Predicated region
        $region25: #{tpu_custom_call.1} parent=23 // pred_check
          %p171 = pneg %p51
        $region26: #{tpu_custom_call.1} parent=23 // pred_check_branch
          %173 = sbr.rel (%p171) target = $region28
        $region27: #{tpu_custom_call.1} parent=23 // pred_region
          %p174 = scmp.lt.s32.totalorder %s19, 1
          %s175 = scalar_select %p174, %s19, 1
          %s176 = smul.addr %s175, 2
          %s177 = smul.addr %s176, 4
          %s178 = scalar_lea.vmem %s0, %s177
        $region28: #{tpu_custom_call.1} parent=23 // pred_fallthru
          _
      $region24: #{tpu_custom_call.1} parent=5 // pred_fallthru
        _
      %p179 = scmp.le.s32.totalorder 1, %s12
      %p180 = scmp.lt.s32.totalorder %s12, 3
      %p181 = pnand %p179, %p180
      %p182 = pneg %p181
      // Predicated region
      $region29: #{tpu_custom_call.1} parent=5 // pred_check
        _
      $region30: #{tpu_custom_call.1} parent=5 // pred_check_branch
        %184 = sbr.rel (%p181) target = $region32
      $region31: #{tpu_custom_call.1} parent=5 // pred_region
        %s185 = ssub.s32 %s12, 1
        %p186 = scmp.lt.s32.totalorder %s22, 1
        %s187 = scalar_select %p186, %s22, 1
        %s188 = smul.addr %s187, 2
        %s189 = smul.addr %s188, 4
        %s190 = scalar_lea.vmem %s0, %s189
        %p191 = pneg %p57
        %p192 = pneg %p54
        %p193 = scmp.lt.s32.totalorder %s24, 0
        %s194 = scalar_select %p193, %s24, 0
        %s195 = smul.addr %s194, 4
        %s196 = scalar_lea.vmem %s1, %s195
        %p197 = pneg %p83
        %p198 = pneg %p80
        %p199 = scmp.lt.s32.totalorder %s24, 0
        %s200 = scalar_select %p199, %s24, 0
        %s201 = scalar_lea.vmem %s2, %s200
        %p202 = pneg %p109
        %p203 = pneg %p106
        %p204 = pneg %p139
        %p205 = pneg %p136
        %s206 = sand.u32 %s126, 1
        %s207 = scalar_lea.sflag [#allocation3], %s206
        %s208 = sand.u32 %s126, 1
        %s209 = smul.addr %s208, 8
        %s210 = scalar_lea.vmem [#allocation2], %s209
        %p211 = scmp.lt.s32.totalorder %s22, 1
        %s212 = scalar_select %p211, %s22, 1
        %s213 = smul.addr %s212, 2
        %s214 = smul.addr %s213, 4
        %s215 = scalar_lea.vmem %s0, %s214
        %p216 = scmp.lt.s32.totalorder %s24, 0
        %s217 = scalar_select %p216, %s24, 0
        %s218 = smul.addr %s217, 4
        %s219 = scalar_lea.vmem %s1, %s218
        %p220 = scmp.lt.s32.totalorder %s24, 0
        %s221 = scalar_select %p220, %s24, 0
        %s222 = scalar_lea.vmem %s2, %s221
        %s223 = smul.u32 2, %s23
        %s225 = smul.u32 %s23, 16
        %s226 = sshra.s32 %s225, 3
        %s227 = sand.u32 %s225, 7
        %s228 = smul.addr %s226, 4
        %s229 = scalar_lea.vmem %s215, %s228
        %v230 = vld [vmem:[%s229] sm:$0xf]
        %v231 = vld [vmem:[%s229 + $0x4] sm:$0xf]
        %v232 = vld [vmem:[%s219] sm:$0xf]
        %v233 = vld [vmem:[%s219 + $0x4] sm:$0xf]
        %v234 = vld [vmem:[%s219 + $0x8] sm:$0xf]
        %v235 = vld [vmem:[%s219 + $0xc] sm:$0xf]
        %v236 = vld [vmem:[%s219 + $0x10] sm:$0xf]
        %v237 = vld [vmem:[%s219 + $0x14] sm:$0xf]
        %v238 = vld [vmem:[%s219 + $0x18] sm:$0xf]
        %v239 = vld [vmem:[%s219 + $0x1c] sm:$0xf]
        %v240 = vld [vmem:[%s222] sm:$0x1]
        %v242 = vlaneseq
        %v243 = vshrl.u32 %v242, 7
        %v244 = vsub.s32 0, %v243
        %v245 = vrot.slane %v240, %v244
        %v249 = vunpack.c.l.b16 %v230
        %v250 = vunpack.c.l.b16 %v231
        %v251 = vpack.c.b16 %v250, %v249
        %v260 = vunpack.c.l.b16 %v232
        %v261 = vunpack.c.l.b16 %v233
        %v262 = vunpack.c.l.b16 %v234
        %v263 = vunpack.c.l.b16 %v235
        %v264 = vunpack.c.l.b16 %v236
        %v265 = vunpack.c.l.b16 %v237
        %v266 = vunpack.c.l.b16 %v238
        %v267 = vunpack.c.l.b16 %v239
        %v268 = vpack.c.b16 %v261, %v260
        %v269 = vpack.c.b16 %v263, %v262
        %v270 = vpack.c.b16 %v265, %v264
        %v271 = vpack.c.b16 %v267, %v266
        %vm276 = vcmask 523264
        %v278 = vsel %vm276, %v251, 0
        %280 = vmatprep.subr.bf16.mxu0 0
        %281 = vmatpush1.bf16.msra.mxu0 %v268
        %282 = vmatprep.subr.bf16.mxu0 0
        %283 = vmatpush1.bf16.msra.mxu0 %v269
        %284 = vmatprep.subr.bf16.mxu0 0
        %285 = vmatpush1.bf16.msra.mxu0 %v270
        %286 = vmatprep.subr.bf16.mxu0 0
        %287 = vmatpush1.bf16.msra.mxu0 %v271
        %288 = vmatprep.subr.bf16.mxu0 0
        %289 = vmatpush1.bf16.msra.mxu0 0
        %290 = vmatprep.subr.bf16.mxu0 0
        %291 = vmatpush1.bf16.msra.mxu0 0
        %292 = vmatprep.subr.bf16.mxu0 0
        %293 = vmatpush1.bf16.msra.mxu0 0
        %294 = vmatprep.subr.bf16.mxu0 0
        %295 = vmatpush1.bf16.msra.mxu0 0
        %296 = vmatprep.subr.bf16.mxu0 0
        %297 = vmatpush1.bf16.msra.mxu0 0
        %298 = vmatprep.subr.bf16.mxu0 0
        %299 = vmatpush1.bf16.msra.mxu0 0
        %300 = vmatprep.subr.bf16.mxu0 0
        %301 = vmatpush1.bf16.msra.mxu0 0
        %302 = vmatprep.subr.bf16.mxu0 0
        %303 = vmatpush1.bf16.msra.mxu0 0
        %304 = vmatprep.subr.bf16.mxu0 0
        %305 = vmatpush1.bf16.msra.mxu0 0
        %306 = vmatprep.subr.bf16.mxu0 0
        %307 = vmatpush1.bf16.msra.mxu0 0
        %308 = vmatprep.subr.bf16.mxu0 0
        %309 = vmatpush1.bf16.msra.mxu0 0
        %310 = vmatprep.subr.bf16.mxu0 0
        %311 = vmatpush1.bf16.msra.mxu0 0
        %312 = vmatprep.mubr.bf16.mxu0 0
        %313 = vmatmul.mubr.bf16.gmra.mrb[0].mxu0 %v278
        %v314 = vpop.f32.mrb[0].mxu0
        %v315 = vadd.f32 %v245, %v314
        %v316 = vpop.f32.mrb[0].mxu0
        %v317 = vpop.f32.mrb[0].mxu0
        %v318 = vadd.f32 %v245, %v317
        %v319 = vpop.f32.mrb[0].mxu0
        %320 = vdwg.mxu0
        %v321 = vpack.c.bf16 %v318, %v315
        %v323 = vunpack.c.l.b16 %v321
        %v324 = vunpack.c.h.b16 %v321
        %v325 = vpack.c.b16 %v323, %v323
        %v326 = vpack.c.b16 %v324, %v324
        %vm329 = vcmask 257024
        %330 = vst.msk [vmem:[%s210] sm:$0xf] %vm329, %v325
        %331 = vst.msk [vmem:[%s210 + $0x4] sm:$0xf] %vm329, %v326
        %s332 = sand.u32 %s126, 1
        %s333 = scalar_lea.sflag [#allocation3], %s332
        %s334 = sand.u32 %s126, 1
        %s335 = smul.addr %s334, 8
        %s336 = scalar_lea.vmem [#allocation2], %s335
        // Predicated region
        $region33: #{tpu_custom_call.1} parent=31 // pred_check
          %p337 = pneg %p136
        $region34: #{tpu_custom_call.1} parent=31 // pred_check_branch
          %339 = sbr.rel (%p337) target = $region36
        $region35: #{tpu_custom_call.1} parent=31 // pred_region
          %s340 = smul.u32 2, %s23
          %s342 = ssub.s32 128, 128
          %343 = vsyncadd %s333, %s342
          %s344 = sadd.s32 %s24, %s340
          %s345 = smul.addr %s22, 2
          %s346 = sadd.s32 %s344, %s345
          %s347 = smul.addr %s346, 64
          %s348 = scalar_lea.hbm %s3, %s347
          %s349 = sshll.u32 %s336, 4
          %s350 = int_to_ptr.vmem [resolvable:$true] %s349
          %355 = dma.vmem_to_hbm [thread:$0]  %s350, 128, %s348, %s333, 64, 64, 4
        $region36: #{tpu_custom_call.1} parent=31 // pred_fallthru
          _
      $region32: #{tpu_custom_call.1} parent=5 // pred_fallthru
        _
      %p356 = scmp.le.s32.totalorder 2, %s12
      // Predicated region
      $region37: #{tpu_custom_call.1} parent=5 // pred_check
        %p357 = pneg %p356
      $region38: #{tpu_custom_call.1} parent=5 // pred_check_branch
        %359 = sbr.rel (%p357) target = $region40
      $region39: #{tpu_custom_call.1} parent=5 // pred_region
        %s360 = ssub.s32 %s12, 2
        // Predicated region
        $region41: #{tpu_custom_call.1} parent=39 // pred_check
          %p361 = pneg %p142
        $region42: #{tpu_custom_call.1} parent=39 // pred_check_branch
          %363 = sbr.rel (%p361) target = $region44
        $region43: #{tpu_custom_call.1} parent=39 // pred_region
          %s364 = sand.u32 %s127, 1
          %s365 = scalar_lea.sflag [#allocation3], %s364
          %s366 = sand.u32 %s127, 1
          %s367 = smul.addr %s366, 8
          %s368 = scalar_lea.vmem [#allocation2], %s367
          %369 = dma.done %s365, 128
        $region44: #{tpu_custom_call.1} parent=39 // pred_fallthru
          _
      $region40: #{tpu_custom_call.1} parent=5 // pred_fallthru
        _
    $region6: #{tpu_custom_call.1} parent=1 // loop_footer
      %s16 = sadd.s32 1, %s12
    $region7: #{tpu_custom_call.1} parent=1 // loop_footer_branch
      %11 = sbr.rel target = $region3
    $region8: #{tpu_custom_call.1} parent=1 // loop_exit
      _
    %370 = vsyncpa [#allocation3], 1
    %s371 = scalar_lea.sflag [#allocation3], 1
    %372 = vsyncpa %s371, 1

</llo_original>
